<compile_context>
chip_gen: v6e
topology: v6e:2x2x1
jax: 0.10.0
libtpu: 0.0.40
codegen_flags: <defaults>
</compile_context>

<pallas_src>
import math

import jax
import jax.numpy as jnp
from jax import lax
from jax.experimental import pallas as pl
from jax.experimental.pallas import tpu as pltpu

_LANE = 128
_SUBLANE = 8
_CHUNK = 64            # rows per inner accumulation chunk (multiple of 16 for bf16 tiles)
_SMOOTH = 1e-5
_NEG_PAD = -1e9        # sigmoid(-1e9)==0 and BCE(-1e9, 0)==0 exactly


def _round_up(x: int, m: int) -> int:
    return ((x + m - 1) // m) * m


def _cdiv(a: int, b: int) -> int:
    return (a + b - 1) // b


def _make_seg_loss_kernel(rows_tile: int):
    n_chunks = rows_tile // _CHUNK
    groups = _CHUNK // _SUBLANE

    def seg_loss_kernel(pred_ref, gt_ref, acc_ref):
        k = pl.program_id(2)

        def fold(v):  # (CHUNK, 128) -> (8, 128): pure VPU sublane-group adds, no XLU
            return jnp.sum(v.reshape(groups, _SUBLANE, _LANE), axis=0)

        def chunk_body(c, carry):
            a_py, a_p, a_y, a_b = carry
            r0 = pl.multiple_of(c * _CHUNK, _CHUNK)
            # bf16 in HBM/VMEM, upcast to f32 for all compute (v5e-safe).
            x = pred_ref[0, pl.ds(r0, _CHUNK), :].astype(jnp.float32)
            y = gt_ref[0, pl.ds(r0, _CHUNK), :].astype(jnp.float32)
            # Two EUP transcendentals per element (tanh + log):
            #   sigmoid(x)       = 0.5 * (1 + tanh(x/2))
            #   log1p(exp(-|x|)) = -log(sigmoid(|x|)) = -log(0.5 * (1 + |tanh(x/2)|))
            t = jnp.tanh(0.5 * x)
            p = 0.5 * (t + 1.0)
            softplus_neg = -jnp.log(0.5 * (jnp.abs(t) + 1.0))
            bce = jnp.maximum(x, 0.0) - x * y + softplus_neg
            return (a_py + fold(p * y),   # intersection
                    a_p + fold(p),        # sum(sigmoid(pred))
                    a_y + fold(y),        # sum(gt)
                    a_b + fold(bce))      # BCE sum

        zeros = jnp.zeros((_SUBLANE, _LANE), jnp.float32)
        a_py, a_p, a_y, a_b = lax.fori_loop(
            0, n_chunks, chunk_body, (zeros, zeros, zeros, zeros),
            unroll=True if n_chunks <= 8 else 8)

        @pl.when(k == 0)
        def _init():
            acc_ref[...] = jnp.zeros_like(acc_ref)

        # One set of lane-dense (8,128) writes per grid step.
        acc_ref[0, 0, 0:8, :] += a_py
        acc_ref[0, 0, 8:16, :] += a_p
        acc_ref[0, 0, 16:24, :] += a_y
        acc_ref[0, 0, 24:32, :] += a_b

    return seg_loss_kernel


def segmentation_loss(pred_masks, gt_masks, alpha: float = 0.5,
                      max_rows_tile: int = 8192, parallel_chunks=None):
    """pred_masks, gt_masks: (B, 1, H, W) (any trailing dims). Returns scalar f32."""
    assert pred_masks.shape == gt_masks.shape
    B = pred_masks.shape[0]
    hw = int(math.prod(pred_masks.shape[1:]))

    if parallel_chunks is None:
        # Give v7x's second TensorCore a parallel axis when the batch can't be split.
        parallel_chunks = 2 if B < 2 else 1

    # bf16 streaming: gt in {0,1} is exact; pred logits lose ~3 decimal digits.
    pred2d = pred_masks.reshape(B, hw).astype(jnp.bfloat16)
    gt2d = gt_masks.reshape(B, hw).astype(jnp.bfloat16)

    # Lane-dense layout: flatten the spatial axis into (rows, 128) per batch element,
    # with minimal padding (at most ~one 64-row chunk per tile).
    rows = _cdiv(hw, _LANE)
    rows_c = _round_up(rows, _CHUNK)
    max_rt = _round_up(max(min(int(max_rows_tile), rows_c), _CHUNK), _CHUNK)
    num_tiles = _round_up(_cdiv(rows_c, max_rt), parallel_chunks)
    rows_tile = _round_up(_cdiv(rows_c, num_tiles), _CHUNK)
    rows_padded = num_tiles * rows_tile
    tiles_per_chunk = num_tiles // parallel_chunks

    pad = rows_padded * _LANE - hw
    if pad:
        # Neutral padding: contributes exactly 0 to every accumulated sum.
        pred2d = jnp.pad(pred2d, ((0, 0), (0, pad)), constant_values=_NEG_PAD)
        gt2d = jnp.pad(gt2d, ((0, 0), (0, pad)), constant_values=0.0)

    pred3d = pred2d.reshape(B, rows_padded, _LANE)
    gt3d = gt2d.reshape(B, rows_padded, _LANE)

    kernel = _make_seg_loss_kernel(rows_tile)
    partials = pl.pallas_call(
        kernel,
        out_shape=jax.ShapeDtypeStruct(
            (B, parallel_chunks, 4 * _SUBLANE, _LANE), jnp.float32),
        grid_spec=pltpu.PrefetchScalarGridSpec(
            num_scalar_prefetch=0,
            grid=(B, parallel_chunks, tiles_per_chunk),
            in_specs=[
                pl.BlockSpec((1, rows_tile, _LANE),
                             lambda b, c, k: (b, c * tiles_per_chunk + k, 0)),
                pl.BlockSpec((1, rows_tile, _LANE),
                             lambda b, c, k: (b, c * tiles_per_chunk + k, 0)),
            ],
            out_specs=pl.BlockSpec((1, 1, 4 * _SUBLANE, _LANE),
                                   lambda b, c, k: (b, c, 0, 0)),
        ),
        compiler_params=pltpu.CompilerParams(
            dimension_semantics=("parallel", "parallel", "arbitrary"),
            vmem_limit_bytes=32 * 1024 * 1024,
        ),
    )(pred3d, gt3d)

    # Tiny final combine in plain JAX (cross-lane reduce + scalar math).
    sums = partials.reshape(B, parallel_chunks, 4, _SUBLANE * _LANE).sum(axis=(1, 3))
    inter, sum_p, sum_y, bce_sum = sums[:, 0], sums[:, 1], sums[:, 2], sums[:, 3]
    union = sum_p + sum_y
    dice_loss = 1.0 - (2.0 * inter + _SMOOTH) / (union + _SMOOTH)
    iou_loss = 1.0 - (inter + _SMOOTH) / (union - inter + _SMOOTH)
    bce_loss = jnp.sum(bce_sum) / float(B * hw)   # mean over the TRUE element count
    return (alpha * jnp.mean(dice_loss)
            + (1.0 - alpha) * jnp.mean(iou_loss)
            + bce_loss)


def _reference_loss(pred_masks, gt_masks, alpha=0.5):
    # Pure-JAX reference mirroring the PyTorch module (f32 inputs).
    smooth = 1e-5
    x = pred_masks.astype(jnp.float32)
    y = gt_masks.astype(jnp.float32)
    bce = jnp.mean(jnp.maximum(x, 0.0) - x * y + jnp.log1p(jnp.exp(-jnp.abs(x))))
    p = jax.nn.sigmoid(x)
    axes = tuple(range(1, x.ndim))
    inter = jnp.sum(p * y, axis=axes)
    union = jnp.sum(p, axis=axes) + jnp.sum(y, axis=axes)
    dice = 1.0 - (2.0 * inter + smooth) / (union + smooth)
    iou = 1.0 - (inter + smooth) / (union - inter + smooth)
    return alpha * dice.mean() + (1.0 - alpha) * iou.mean() + bce


if __name__ == "__main__":
    key = jax.random.PRNGKey(0)

    configs = [
        ((2, 1, 16, 16), 8192),    # single tile, padded tail
        ((2, 1, 20, 20), 8192),    # HW=400 not a multiple of 128
        ((2, 1, 128, 128), 64),    # multiple tiles along the "arbitrary" axis, no pad
        ((1, 1, 96, 96), 8192),    # B=1 -> parallel_chunks=2 (megacore) path
        ((2, 1, 128, 128), 8192),  # multi-chunk inner fori_loop, no pad
    ]
    for i, (shape, mrt) in enumerate(configs):
        k1, k2 = jax.random.split(jax.random.fold_in(key, i))
        pred_masks = jax.random.normal(k1, shape, dtype=jnp.float32) * 2.0
        gt_masks = (jax.random.uniform(k2, shape) > 0.5).astype(jnp.float32)

        loss = segmentation_loss(pred_masks, gt_masks, alpha=0.5,
                                 max_rows_tile=mrt)
        loss = jax.block_until_ready(loss)
        ref = _reference_loss(pred_masks, gt_masks, alpha=0.5)
        # Tolerance covers bf16 input streaming of the logits (~2^-9 relative).
        assert jnp.allclose(loss, ref, atol=3e-3, rtol=3e-3), (shape, float(loss), float(ref))

    print("KERNEL_OK")
</pallas_src>

<mosaic_0001>
module attributes {stable_mosaic.version = 11 : i64} {
  func.func @seg_loss_kernel(%arg0: i32, %arg1: i32, %arg2: i32, %arg3: memref<1x64x128xbf16, #tpu.memory_space<vmem>>, %arg4: memref<1x64x128xbf16, #tpu.memory_space<vmem>>, %arg5: memref<1x1x32x128xf32, #tpu.memory_space<vmem>>) attributes {dimension_semantics = [#tpu.dimension_semantics<parallel>, #tpu.dimension_semantics<parallel>, #tpu.dimension_semantics<arbitrary>], iteration_bounds = array<i64: 2, 1, 1>, scalar_prefetch = 0 : i64, scratch_operands = 0 : i64, tpu.core_type = #tpu.core_type<tc>, window_params = [{transform_indices = @transform_0, window_bounds = array<i64: 1, 64, 128>}, {transform_indices = @transform_1, window_bounds = array<i64: 1, 64, 128>}, {transform_indices = @transform_2, window_bounds = array<i64: 1, 1, 32, 128>}]} {
    %cst = arith.constant 0.000000e+00 : f32
    %0 = vector.broadcast %cst : f32 to vector<8x128xf32>
    %c0_i32 = arith.constant 0 : i32
    %c64_i32 = arith.constant 64 : i32
    %1 = arith.muli %c0_i32, %c64_i32 : i32
    %2 = tpu.assume_multiple %1, 64 : i32
    %c0 = arith.constant 0 : index
    %3 = arith.index_cast %2 : i32 to index
    %c0_0 = arith.constant 0 : index
    %4 = vector.load %arg3[%c0, %3, %c0_0] : memref<1x64x128xbf16, #tpu.memory_space<vmem>>, vector<1x64x128xbf16>
    %5 = vector.shape_cast %4 : vector<1x64x128xbf16> to vector<64x128xbf16>
    %6 = arith.extf %5 : vector<64x128xbf16> to vector<64x128xf32>
    %c0_1 = arith.constant 0 : index
    %7 = arith.index_cast %2 : i32 to index
    %c0_2 = arith.constant 0 : index
    %8 = vector.load %arg4[%c0_1, %7, %c0_2] : memref<1x64x128xbf16, #tpu.memory_space<vmem>>, vector<1x64x128xbf16>
    %9 = vector.shape_cast %8 : vector<1x64x128xbf16> to vector<64x128xbf16>
    %10 = arith.extf %9 : vector<64x128xbf16> to vector<64x128xf32>
    %cst_3 = arith.constant 5.000000e-01 : f32
    %11 = vector.broadcast %cst_3 : f32 to vector<64x128xf32>
    %12 = arith.mulf %11, %6 : vector<64x128xf32>
    %13 = math.tanh %12 : vector<64x128xf32>
    %cst_4 = arith.constant 1.000000e+00 : f32
    %14 = vector.broadcast %cst_4 : f32 to vector<64x128xf32>
    %15 = arith.addf %13, %14 : vector<64x128xf32>
    %cst_5 = arith.constant 5.000000e-01 : f32
    %16 = vector.broadcast %cst_5 : f32 to vector<64x128xf32>
    %17 = arith.mulf %16, %15 : vector<64x128xf32>
    %18 = math.absf %13 : vector<64x128xf32>
    %cst_6 = arith.constant 1.000000e+00 : f32
    %19 = vector.broadcast %cst_6 : f32 to vector<64x128xf32>
    %20 = arith.addf %18, %19 : vector<64x128xf32>
    %cst_7 = arith.constant 5.000000e-01 : f32
    %21 = vector.broadcast %cst_7 : f32 to vector<64x128xf32>
    %22 = arith.mulf %21, %20 : vector<64x128xf32>
    %23 = math.log %22 : vector<64x128xf32>
    %cst_8 = arith.constant 0.000000e+00 : f32
    %24 = vector.broadcast %cst_8 : f32 to vector<64x128xf32>
    %25 = arith.subf %24, %23 : vector<64x128xf32>
    %cst_9 = arith.constant 0.000000e+00 : f32
    %26 = vector.broadcast %cst_9 : f32 to vector<64x128xf32>
    %27 = arith.maximumf %6, %26 : vector<64x128xf32>
    %28 = arith.mulf %6, %10 : vector<64x128xf32>
    %29 = arith.subf %27, %28 : vector<64x128xf32>
    %30 = arith.addf %29, %25 : vector<64x128xf32>
    %31 = arith.mulf %17, %10 : vector<64x128xf32>
    %32 = vector.shape_cast %31 : vector<64x128xf32> to vector<8x8x128xf32>
    %cst_10 = arith.constant dense<0.000000e+00> : vector<8x128xf32>
    %33 = vector.multi_reduction <add>, %32, %cst_10 [0] : vector<8x8x128xf32> to vector<8x128xf32>
    %34 = arith.addf %0, %33 : vector<8x128xf32>
    %35 = vector.shape_cast %17 : vector<64x128xf32> to vector<8x8x128xf32>
    %cst_11 = arith.constant dense<0.000000e+00> : vector<8x128xf32>
    %36 = vector.multi_reduction <add>, %35, %cst_11 [0] : vector<8x8x128xf32> to vector<8x128xf32>
    %37 = arith.addf %0, %36 : vector<8x128xf32>
    %38 = vector.shape_cast %10 : vector<64x128xf32> to vector<8x8x128xf32>
    %cst_12 = arith.constant dense<0.000000e+00> : vector<8x128xf32>
    %39 = vector.multi_reduction <add>, %38, %cst_12 [0] : vector<8x8x128xf32> to vector<8x128xf32>
    %40 = arith.addf %0, %39 : vector<8x128xf32>
    %41 = vector.shape_cast %30 : vector<64x128xf32> to vector<8x8x128xf32>
    %cst_13 = arith.constant dense<0.000000e+00> : vector<8x128xf32>
    %42 = vector.multi_reduction <add>, %41, %cst_13 [0] : vector<8x8x128xf32> to vector<8x128xf32>
    %43 = arith.addf %0, %42 : vector<8x128xf32>
    %c1_i32 = arith.constant 1 : i32
    %c0_i32_14 = arith.constant 0 : i32
    %44 = arith.cmpi eq, %arg2, %c0_i32_14 : i32
    %45 = arith.extui %44 : i1 to i32
    %c0_i32_15 = arith.constant 0 : i32
    %46 = arith.cmpi ne, %45, %c0_i32_15 : i32
    scf.if %46 {
      %cst_45 = arith.constant 0.000000e+00 : f32
      %71 = vector.broadcast %cst_45 : f32 to vector<1x1x32x128xf32>
      %c0_46 = arith.constant 0 : index
      %c0_47 = arith.constant 0 : index
      %c0_48 = arith.constant 0 : index
      %c0_49 = arith.constant 0 : index
      %72 = vector.load %arg5[%c0_46, %c0_47, %c0_48, %c0_49] : memref<1x1x32x128xf32, #tpu.memory_space<vmem>>, vector<1x1x32x128xf32>
      tpu.vector_store %arg5[%c0_46, %c0_47, %c0_48, %c0_49], %71 {strides = array<i32>} : memref<1x1x32x128xf32, #tpu.memory_space<vmem>>, vector<1x1x32x128xf32>,
    } else {
    }
    %c0_16 = arith.constant 0 : index
    %c0_17 = arith.constant 0 : index
    %c0_18 = arith.constant 0 : index
    %c0_19 = arith.constant 0 : index
    %47 = vector.load %arg5[%c0_16, %c0_17, %c0_18, %c0_19] : memref<1x1x32x128xf32, #tpu.memory_space<vmem>>, vector<1x1x8x128xf32>
    %48 = vector.shape_cast %47 : vector<1x1x8x128xf32> to vector<8x128xf32>
    %49 = arith.addf %48, %34 : vector<8x128xf32>
    %c0_20 = arith.constant 0 : index
    %c0_21 = arith.constant 0 : index
    %c0_22 = arith.constant 0 : index
    %c0_23 = arith.constant 0 : index
    %50 = vector.load %arg5[%c0_20, %c0_21, %c0_22, %c0_23] : memref<1x1x32x128xf32, #tpu.memory_space<vmem>>, vector<1x1x8x128xf32>
    %51 = vector.shape_cast %50 : vector<1x1x8x128xf32> to vector<8x128xf32>
    %52 = vector.shape_cast %49 : vector<8x128xf32> to vector<1x1x8x128xf32>
    tpu.vector_store %arg5[%c0_20, %c0_21, %c0_22, %c0_23], %52 {strides = array<i32>} : memref<1x1x32x128xf32, #tpu.memory_space<vmem>>, vector<1x1x8x128xf32>,
    %c0_24 = arith.constant 0 : index
    %c0_25 = arith.constant 0 : index
    %c8 = arith.constant 8 : index
    %c0_26 = arith.constant 0 : index
    %53 = vector.load %arg5[%c0_24, %c0_25, %c8, %c0_26] : memref<1x1x32x128xf32, #tpu.memory_space<vmem>>, vector<1x1x8x128xf32>
    %54 = vector.shape_cast %53 : vector<1x1x8x128xf32> to vector<8x128xf32>
    %55 = arith.addf %54, %37 : vector<8x128xf32>
    %c0_27 = arith.constant 0 : index
    %c0_28 = arith.constant 0 : index
    %c8_29 = arith.constant 8 : index
    %c0_30 = arith.constant 0 : index
    %56 = vector.load %arg5[%c0_27, %c0_28, %c8_29, %c0_30] : memref<1x1x32x128xf32, #tpu.memory_space<vmem>>, vector<1x1x8x128xf32>
    %57 = vector.shape_cast %56 : vector<1x1x8x128xf32> to vector<8x128xf32>
    %58 = vector.shape_cast %55 : vector<8x128xf32> to vector<1x1x8x128xf32>
    tpu.vector_store %arg5[%c0_27, %c0_28, %c8_29, %c0_30], %58 {strides = array<i32>} : memref<1x1x32x128xf32, #tpu.memory_space<vmem>>, vector<1x1x8x128xf32>,
    %c0_31 = arith.constant 0 : index
    %c0_32 = arith.constant 0 : index
    %c16 = arith.constant 16 : index
    %c0_33 = arith.constant 0 : index
    %59 = vector.load %arg5[%c0_31, %c0_32, %c16, %c0_33] : memref<1x1x32x128xf32, #tpu.memory_space<vmem>>, vector<1x1x8x128xf32>
    %60 = vector.shape_cast %59 : vector<1x1x8x128xf32> to vector<8x128xf32>
    %61 = arith.addf %60, %40 : vector<8x128xf32>
    %c0_34 = arith.constant 0 : index
    %c0_35 = arith.constant 0 : index
    %c16_36 = arith.constant 16 : index
    %c0_37 = arith.constant 0 : index
    %62 = vector.load %arg5[%c0_34, %c0_35, %c16_36, %c0_37] : memref<1x1x32x128xf32, #tpu.memory_space<vmem>>, vector<1x1x8x128xf32>
    %63 = vector.shape_cast %62 : vector<1x1x8x128xf32> to vector<8x128xf32>
    %64 = vector.shape_cast %61 : vector<8x128xf32> to vector<1x1x8x128xf32>
    tpu.vector_store %arg5[%c0_34, %c0_35, %c16_36, %c0_37], %64 {strides = array<i32>} : memref<1x1x32x128xf32, #tpu.memory_space<vmem>>, vector<1x1x8x128xf32>,
    %c0_38 = arith.constant 0 : index
    %c0_39 = arith.constant 0 : index
    %c24 = arith.constant 24 : index
    %c0_40 = arith.constant 0 : index
    %65 = vector.load %arg5[%c0_38, %c0_39, %c24, %c0_40] : memref<1x1x32x128xf32, #tpu.memory_space<vmem>>, vector<1x1x8x128xf32>
    %66 = vector.shape_cast %65 : vector<1x1x8x128xf32> to vector<8x128xf32>
    %67 = arith.addf %66, %43 : vector<8x128xf32>
    %c0_41 = arith.constant 0 : index
    %c0_42 = arith.constant 0 : index
    %c24_43 = arith.constant 24 : index
    %c0_44 = arith.constant 0 : index
    %68 = vector.load %arg5[%c0_41, %c0_42, %c24_43, %c0_44] : memref<1x1x32x128xf32, #tpu.memory_space<vmem>>, vector<1x1x8x128xf32>
    %69 = vector.shape_cast %68 : vector<1x1x8x128xf32> to vector<8x128xf32>
    %70 = vector.shape_cast %67 : vector<8x128xf32> to vector<1x1x8x128xf32>
    tpu.vector_store %arg5[%c0_41, %c0_42, %c24_43, %c0_44], %70 {strides = array<i32>} : memref<1x1x32x128xf32, #tpu.memory_space<vmem>>, vector<1x1x8x128xf32>,
    return
  }
  func.func @transform_0(%arg0: i32, %arg1: i32, %arg2: i32) -> (i32, i32, i32) {
    %c1_i32 = arith.constant 1 : i32
    %0 = arith.muli %arg1, %c1_i32 : i32
    %1 = arith.addi %0, %arg2 : i32
    %c0_i32 = arith.constant 0 : i32
    %c0_i32_0 = arith.constant 0 : i32
    return %arg0, %1, %c0_i32 : i32, i32, i32
  }
  func.func @transform_1(%arg0: i32, %arg1: i32, %arg2: i32) -> (i32, i32, i32) {
    %c1_i32 = arith.constant 1 : i32
    %0 = arith.muli %arg1, %c1_i32 : i32
    %1 = arith.addi %0, %arg2 : i32
    %c0_i32 = arith.constant 0 : i32
    %c0_i32_0 = arith.constant 0 : i32
    return %arg0, %1, %c0_i32 : i32, i32, i32
  }
  func.func @transform_2(%arg0: i32, %arg1: i32, %arg2: i32) -> (i32, i32, i32, i32) {
    %c0_i32 = arith.constant 0 : i32
    %c0_i32_0 = arith.constant 0 : i32
    %c0_i32_1 = arith.constant 0 : i32
    return %arg0, %arg1, %c0_i32, %c0_i32_0 : i32, i32, i32, i32
  }
}

</mosaic_0001>

<llo_original>
// kernel: tpu_custom_call.1
$region0: #{tpu_custom_call.1}
  #allocation0 [shape = 'u32[]', space=smem, size = 0x4, offset = 0x4, fixed_abs, tag = 'smem constant byte address 0x4 - core index']
  #allocation1 [shape = 'u32[144,128]{1,0:T(1,128)}', space=vmem, size = 0x12000, scoped, tag = 'internal scratch']
  %s0 = inlined_call_operand.hbm [shape: bf16[2,64,128], index: 0, kind: input, shape index: {}]
  %s1 = inlined_call_operand.hbm [shape: bf16[2,64,128], index: 1, kind: input, shape index: {}]
  %s2 = inlined_call_operand.hbm [shape: f32[2,1,32,128], index: 2, kind: output, shape index: {}]
  %s3 = sld [smem:[#allocation0]]
  $region53: #{tpu_custom_call.1} parent=0
    _
  %s5 = ssub.s32 1, %s3
  %s6 = scalar_select 0, %s5, %s3
  $region1: #{tpu_custom_call.1} parent=0
    #allocation2 [shape = 'u8[32768]{0}', space=vmem, size = 0x8000, scoped, tag = 'input window, operand 0']
    #allocation3 [shape = 's32[2]{0}', space=sflag, size = 0x8, scoped, tag = 'scoped memory for tpu_custom_call.1']
    #allocation4 [shape = 's32[2]{0}', space=sflag, size = 0x8, scoped, tag = 'scoped memory for tpu_custom_call.1']
    #allocation5 [shape = 'u8[32768]{0}', space=vmem, size = 0x8000, scoped, tag = 'input window, operand 1']
    #allocation6 [shape = 's32[2]{0}', space=sflag, size = 0x8, scoped, tag = 'scoped memory for tpu_custom_call.1']
    #allocation7 [shape = 'u8[32768]{0}', space=vmem, size = 0x8000, scoped, tag = 'output window, operand 0']
    %7 = vsyncpa [#allocation3], 0
    %s8 = scalar_lea.sflag [#allocation3], 1
    %9 = vsyncpa %s8, 0
    %10 = vsyncpa [#allocation6], 0
    %s11 = scalar_lea.sflag [#allocation6], 1
    %12 = vsyncpa %s11, 0
    %13 = vsyncpa [#allocation4], 0
    %s14 = scalar_lea.sflag [#allocation4], 1
    %15 = vsyncpa %s14, 0
    loop: start=0, step=1, limit=4
    $region2: #{tpu_custom_call.1} parent=1 // loop_pre_header
      _
    $region3: #{tpu_custom_call.1} parent=1 // loop_header
      %s17 = sphi 0, %s21
      %p18 = scmp.ge.s32.totalorder %s17, 4
      %s24 = sphi 0, %s43
      %s25 = sphi 0, %s39
      %s26 = sphi 0, %s35
      %s27 = sphi 0, %s24
      %s28 = sphi 0, %s25
      %s29 = sphi 0, %s26
      %s30 = sphi 0, %s27
      %s31 = sphi 0, %s28
      %s32 = sphi 0, %s29
      %s50 = sphi 0, %s52
      %s53 = sphi 0, %s50
      %s54 = sphi 0, %s53
      %s70 = sphi 0, %s54
      %s80 = sphi 0, %s82
      %s83 = sphi 0, %s80
      %s84 = sphi 0, %s83
      %s100 = sphi 0, %s84
      %s108 = sphi 0, %s110
      %s111 = sphi 0, %s108
      %s112 = sphi 0, %s111
      %s128 = sphi 0, %s112
    $region4: #{tpu_custom_call.1} parent=1 // loop_header_branch
      %20 = sbr.rel (%p18) target = $region8
    $region5: #{tpu_custom_call.1} parent=1 // loop_body
      %s22 = ssub.s32 %s17, 1
      %s23 = ssub.s32 %s17, 2
      %s33 = sadd.s32 1, %s26
      %p34 = scmp.ge.s32.totalorder %s33, 1
      %s35 = scalar_select %p34, 0, %s33
      %s36 = sadd.s32 1, %s25
      %s37 = scalar_select %p34, %s36, %s25
      %p38 = scmp.ge.s32.totalorder %s37, 1
      %s39 = scalar_select %p38, 0, %s37
      %s40 = sadd.s32 1, %s24
      %s41 = scalar_select %p38, %s40, %s24
      %p42 = scmp.ge.s32.totalorder %s41, 2
      %s43 = scalar_select %p42, 0, %s41
      %s44 = sadd.s32 %s25, %s26
      %s45 = sadd.s32 %s39, %s35
      %s46 = ssub.s32 %s24, %s43
      %s47 = ssub.s32 %s44, %s45
      %s48 = sor.u32 %s46, %s47
      %p49 = scmp.eq.s32.totalorder %s48, 0
      %s51 = sadd.s32 %s50, 1
      %s52 = scalar_select %p49, %s50, %s51
      %p55 = pneg %p49
      %p56 = scmp.eq.s32.totalorder %s17, 1
      %p57 = por %p55, %p56
      %p58 = scmp.ne.s32.totalorder %s50, %s53
      %p59 = scmp.eq.s32.totalorder %s17, 0
      %p60 = por %p58, %p59
      %p61 = scmp.ne.s32.totalorder %s50, %s53
      %p62 = scmp.eq.s32.totalorder %s22, 1
      %p63 = por %p61, %p62
      %p64 = scmp.ne.s32.totalorder %s53, %s54
      %p65 = scmp.eq.s32.totalorder %s22, 0
      %p66 = por %p64, %p65
      %p67 = scmp.ne.s32.totalorder %s53, %s54
      %p68 = scmp.eq.s32.totalorder %s23, 1
      %p69 = por %p67, %p68
      %p71 = scmp.ne.s32.totalorder %s54, %s70
      %p72 = scmp.eq.s32.totalorder %s23, 0
      %p73 = por %p71, %p72
      %s74 = sadd.s32 %s25, %s26
      %s75 = sadd.s32 %s39, %s35
      %s76 = ssub.s32 %s24, %s43
      %s77 = ssub.s32 %s74, %s75
      %s78 = sor.u32 %s76, %s77
      %p79 = scmp.eq.s32.totalorder %s78, 0
      %s81 = sadd.s32 %s80, 1
      %s82 = scalar_select %p79, %s80, %s81
      %p85 = pneg %p79
      %p86 = scmp.eq.s32.totalorder %s17, 1
      %p87 = por %p85, %p86
      %p88 = scmp.ne.s32.totalorder %s80, %s83
      %p89 = scmp.eq.s32.totalorder %s17, 0
      %p90 = por %p88, %p89
      %p91 = scmp.ne.s32.totalorder %s80, %s83
      %p92 = scmp.eq.s32.totalorder %s22, 1
      %p93 = por %p91, %p92
      %p94 = scmp.ne.s32.totalorder %s83, %s84
      %p95 = scmp.eq.s32.totalorder %s22, 0
      %p96 = por %p94, %p95
      %p97 = scmp.ne.s32.totalorder %s83, %s84
      %p98 = scmp.eq.s32.totalorder %s23, 1
      %p99 = por %p97, %p98
      %p101 = scmp.ne.s32.totalorder %s84, %s100
      %p102 = scmp.eq.s32.totalorder %s23, 0
      %p103 = por %p101, %p102
      %s104 = ssub.s32 %s24, %s43
      %s105 = ssub.s32 %s25, %s39
      %s106 = sor.u32 %s104, %s105
      %p107 = scmp.eq.s32.totalorder %s106, 0
      %s109 = sadd.s32 %s108, 1
      %s110 = scalar_select %p107, %s108, %s109
      %p113 = pneg %p107
      %p114 = scmp.eq.s32.totalorder %s17, 1
      %p115 = por %p113, %p114
      %p116 = scmp.ne.s32.totalorder %s108, %s111
      %p117 = scmp.eq.s32.totalorder %s17, 0
      %p118 = por %p116, %p117
      %p119 = scmp.ne.s32.totalorder %s108, %s111
      %p120 = scmp.eq.s32.totalorder %s22, 1
      %p121 = por %p119, %p120
      %p122 = scmp.ne.s32.totalorder %s111, %s112
      %p123 = scmp.eq.s32.totalorder %s22, 0
      %p124 = por %p122, %p123
      %p125 = scmp.ne.s32.totalorder %s111, %s112
      %p126 = scmp.eq.s32.totalorder %s23, 1
      %p127 = por %p125, %p126
      %p129 = scmp.ne.s32.totalorder %s112, %s128
      %p130 = scmp.eq.s32.totalorder %s23, 0
      %p131 = por %p129, %p130
      %p132 = scmp.le.s32.totalorder 1, %s17
      %p133 = scmp.lt.s32.totalorder %s17, 3
      %p134 = pnand %p132, %p133
      %p135 = pneg %p134
      // Predicated region
      $region9: #{tpu_custom_call.1} parent=5 // pred_check
        _
      $region10: #{tpu_custom_call.1} parent=5 // pred_check_branch
        %137 = sbr.rel (%p134) target = $region12
      $region11: #{tpu_custom_call.1} parent=5 // pred_region
        %s138 = ssub.s32 %s17, 1
      $region12: #{tpu_custom_call.1} parent=5 // pred_fallthru
        _
      %p139 = scmp.lt.s32.totalorder %s17, 2
      // Predicated region
      $region13: #{tpu_custom_call.1} parent=5 // pred_check
        %p140 = pneg %p139
      $region14: #{tpu_custom_call.1} parent=5 // pred_check_branch
        %142 = sbr.rel (%p140) target = $region16
      $region15: #{tpu_custom_call.1} parent=5 // pred_region
        // Predicated region
        $region17: #{tpu_custom_call.1} parent=15 // pred_check
          %p143 = pneg %p60
        $region18: #{tpu_custom_call.1} parent=15 // pred_check_branch
          %145 = sbr.rel (%p143) target = $region20
        $region19: #{tpu_custom_call.1} parent=15 // pred_region
          %s146 = sand.u32 %s50, 1
          %s147 = scalar_lea.sflag [#allocation3], %s146
          %s148 = sand.u32 %s50, 1
          %s149 = smul.addr %s148, 32
          %s150 = scalar_lea.vmem [#allocation2], %s149
          %s151 = sadd.s32 %s25, %s26
          %s152 = smul.u32 8, %s151
          %s154 = ssub.s32 512, 512
          %155 = vsyncadd %s147, %s154
          %s156 = smul.addr %s24, 8
          %s157 = sadd.s32 %s152, %s156
          %s158 = smul.addr %s157, 64
          %s159 = scalar_lea.hbm %s0, %s158
          %s160 = sshll.u32 %s150, 4
          %s161 = int_to_ptr.vmem [resolvable:$true] %s160
          %166 = dma.hbm_to_vmem [thread:$0]  %s159, 512, %s161, %s147, 64, 64, 4
        $region20: #{tpu_custom_call.1} parent=15 // pred_fallthru
          _
        // Predicated region
        $region21: #{tpu_custom_call.1} parent=15 // pred_check
          %p167 = pneg %p90
        $region22: #{tpu_custom_call.1} parent=15 // pred_check_branch
          %169 = sbr.rel (%p167) target = $region24
        $region23: #{tpu_custom_call.1} parent=15 // pred_region
          %s170 = sand.u32 %s80, 1
          %s171 = scalar_lea.sflag [#allocation6], %s170
          %s172 = sand.u32 %s80, 1
          %s173 = smul.addr %s172, 32
          %s174 = scalar_lea.vmem [#allocation5], %s173
          %s175 = sadd.s32 %s25, %s26
          %s176 = smul.u32 8, %s175
          %s178 = ssub.s32 512, 512
          %179 = vsyncadd %s171, %s178
          %s180 = smul.addr %s24, 8
          %s181 = sadd.s32 %s176, %s180
          %s182 = smul.addr %s181, 64
          %s183 = scalar_lea.hbm %s1, %s182
          %s184 = sshll.u32 %s174, 4
          %s185 = int_to_ptr.vmem [resolvable:$true] %s184
          %190 = dma.hbm_to_vmem [thread:$0]  %s183, 512, %s185, %s171, 64, 64, 4
        $region24: #{tpu_custom_call.1} parent=15 // pred_fallthru
          _
      $region16: #{tpu_custom_call.1} parent=5 // pred_fallthru
        _
      %p191 = scmp.le.s32.totalorder 1, %s17
      %p192 = scmp.lt.s32.totalorder %s17, 3
      %p193 = pnand %p191, %p192
      %p194 = pneg %p193
      // Predicated region
      $region25: #{tpu_custom_call.1} parent=5 // pred_check
        _
      $region26: #{tpu_custom_call.1} parent=5 // pred_check_branch
        %196 = sbr.rel (%p193) target = $region28
      $region27: #{tpu_custom_call.1} parent=5 // pred_region
        %s197 = ssub.s32 %s17, 1
        %s198 = sand.u32 %s53, 1
        %s199 = scalar_lea.sflag [#allocation3], %s198
        %s200 = sand.u32 %s53, 1
        %s201 = smul.addr %s200, 32
        %s202 = scalar_lea.vmem [#allocation2], %s201
        // Predicated region
        $region29: #{tpu_custom_call.1} parent=27 // pred_check
          %p203 = pneg %p66
        $region30: #{tpu_custom_call.1} parent=27 // pred_check_branch
          %205 = sbr.rel (%p203) target = $region32
        $region31: #{tpu_custom_call.1} parent=27 // pred_region
          %206 = dma.done %s199, 512
        $region32: #{tpu_custom_call.1} parent=27 // pred_fallthru
          _
        %s207 = sand.u32 %s83, 1
        %s208 = scalar_lea.sflag [#allocation6], %s207
        %s209 = sand.u32 %s83, 1
        %s210 = smul.addr %s209, 32
        %s211 = scalar_lea.vmem [#allocation5], %s210
        // Predicated region
        $region33: #{tpu_custom_call.1} parent=27 // pred_check
          %p212 = pneg %p96
        $region34: #{tpu_custom_call.1} parent=27 // pred_check_branch
          %214 = sbr.rel (%p212) target = $region36
        $region35: #{tpu_custom_call.1} parent=27 // pred_region
          %215 = dma.done %s208, 512
        $region36: #{tpu_custom_call.1} parent=27 // pred_fallthru
          _
        %s216 = sand.u32 %s53, 1
        %s217 = scalar_lea.sflag [#allocation3], %s216
        %s218 = sand.u32 %s53, 1
        %s219 = smul.addr %s218, 32
        %s220 = scalar_lea.vmem [#allocation2], %s219
        %p221 = pneg %p66
        %p222 = pneg %p63
        %s223 = sand.u32 %s83, 1
        %s224 = scalar_lea.sflag [#allocation6], %s223
        %s225 = sand.u32 %s83, 1
        %s226 = smul.addr %s225, 32
        %s227 = scalar_lea.vmem [#allocation5], %s226
        %p228 = pneg %p96
        %p229 = pneg %p93
        %p230 = pneg %p124
        %p231 = pneg %p121
        %s232 = sand.u32 %s111, 1
        %s233 = scalar_lea.sflag [#allocation4], %s232
        %s234 = sand.u32 %s111, 1
        %s235 = smul.addr %s234, 32
        %s236 = scalar_lea.vmem [#allocation7], %s235
        %s237 = sadd.s32 %s28, %s29
        %s238 = smul.u32 8, %s237
        %s239 = sadd.s32 %s28, %s29
        %s240 = smul.u32 8, %s239
        %v241 = vld [vmem:[%s202] sm:$0xf]
        %v242 = vld [vmem:[%s202 + $0x4] sm:$0xf]
        %v243 = vld [vmem:[%s202 + $0x8] sm:$0xf]
        %v244 = vld [vmem:[%s202 + $0xc] sm:$0xf]
        %v245 = vld [vmem:[%s202 + $0x10] sm:$0xf]
        %v246 = vld [vmem:[%s202 + $0x14] sm:$0xf]
        %v247 = vld [vmem:[%s202 + $0x18] sm:$0xf]
        %v248 = vld [vmem:[%s202 + $0x1c] sm:$0xf]
        %v249 = vunpack.c.l.bf16 %v241
        %v250 = vunpack.c.l.bf16 %v242
        %v251 = vunpack.c.l.bf16 %v243
        %v252 = vunpack.c.l.bf16 %v244
        %v253 = vunpack.c.l.bf16 %v245
        %v254 = vunpack.c.l.bf16 %v246
        %v255 = vunpack.c.l.bf16 %v247
        %v256 = vunpack.c.l.bf16 %v248
        %v257 = vld [vmem:[%s211] sm:$0xf]
        %v258 = vld [vmem:[%s211 + $0x4] sm:$0xf]
        %v259 = vld [vmem:[%s211 + $0x8] sm:$0xf]
        %v260 = vld [vmem:[%s211 + $0xc] sm:$0xf]
        %v261 = vld [vmem:[%s211 + $0x10] sm:$0xf]
        %v262 = vld [vmem:[%s211 + $0x14] sm:$0xf]
        %v263 = vld [vmem:[%s211 + $0x18] sm:$0xf]
        %v264 = vld [vmem:[%s211 + $0x1c] sm:$0xf]
        %v265 = vunpack.c.l.bf16 %v257
        %v266 = vunpack.c.l.bf16 %v258
        %v267 = vunpack.c.l.bf16 %v259
        %v268 = vunpack.c.l.bf16 %v260
        %v269 = vunpack.c.l.bf16 %v261
        %v270 = vunpack.c.l.bf16 %v262
        %v271 = vunpack.c.l.bf16 %v263
        %v272 = vunpack.c.l.bf16 %v264
        %v273 = vmul.f32 %v249, 0.5
        %v274 = vmul.f32 %v250, 0.5
        %v275 = vmul.f32 %v251, 0.5
        %v276 = vmul.f32 %v252, 0.5
        %v277 = vmul.f32 %v253, 0.5
        %v278 = vmul.f32 %v254, 0.5
        %v279 = vmul.f32 %v255, 0.5
        %v280 = vmul.f32 %v256, 0.5
        %v281 = vtanh.pop %v273
        %v282 = vtanh.pop %v274
        %v283 = vtanh.pop %v275
        %v284 = vtanh.pop %v276
        %v285 = vtanh.pop %v277
        %v286 = vtanh.pop %v278
        %v287 = vtanh.pop %v279
        %v288 = vtanh.pop %v280
        %v289 = vadd.f32 %v281, 1.0
        %v290 = vadd.f32 %v282, 1.0
        %v291 = vadd.f32 %v283, 1.0
        %v292 = vadd.f32 %v284, 1.0
        %v293 = vadd.f32 %v285, 1.0
        %v294 = vadd.f32 %v286, 1.0
        %v295 = vadd.f32 %v287, 1.0
        %v296 = vadd.f32 %v288, 1.0
        %v297 = vmul.f32 %v289, 0.5
        %v298 = vmul.f32 %v290, 0.5
        %v299 = vmul.f32 %v291, 0.5
        %v300 = vmul.f32 %v292, 0.5
        %v301 = vmul.f32 %v293, 0.5
        %v302 = vmul.f32 %v294, 0.5
        %v303 = vmul.f32 %v295, 0.5
        %v304 = vmul.f32 %v296, 0.5
        %v305 = vand.u32 2147483647, %v281
        %v306 = vand.u32 2147483647, %v282
        %v307 = vand.u32 2147483647, %v283
        %v308 = vand.u32 2147483647, %v284
        %v309 = vand.u32 2147483647, %v285
        %v310 = vand.u32 2147483647, %v286
        %v311 = vand.u32 2147483647, %v287
        %v312 = vand.u32 2147483647, %v288
        %v313 = vadd.f32 %v305, 1.0
        %v314 = vadd.f32 %v306, 1.0
        %v315 = vadd.f32 %v307, 1.0
        %v316 = vadd.f32 %v308, 1.0
        %v317 = vadd.f32 %v309, 1.0
        %v318 = vadd.f32 %v310, 1.0
        %v319 = vadd.f32 %v311, 1.0
        %v320 = vadd.f32 %v312, 1.0
        %v321 = vmul.f32 %v313, 0.5
        %v322 = vmul.f32 %v314, 0.5
        %v323 = vmul.f32 %v315, 0.5
        %v324 = vmul.f32 %v316, 0.5
        %v325 = vmul.f32 %v317, 0.5
        %v326 = vmul.f32 %v318, 0.5
        %v327 = vmul.f32 %v319, 0.5
        %v328 = vmul.f32 %v320, 0.5
        %v329 = vlog2.pop %v321
        %v330 = vmul.f32 %v329, 0.6931472
        %v331 = vlog2.pop %v322
        %v332 = vmul.f32 %v331, 0.6931472
        %v333 = vlog2.pop %v323
        %v334 = vmul.f32 %v333, 0.6931472
        %v335 = vlog2.pop %v324
        %v336 = vmul.f32 %v335, 0.6931472
        %v337 = vlog2.pop %v325
        %v338 = vmul.f32 %v337, 0.6931472
        %v339 = vlog2.pop %v326
        %v340 = vmul.f32 %v339, 0.6931472
        %v341 = vlog2.pop %v327
        %v342 = vmul.f32 %v341, 0.6931472
        %v343 = vlog2.pop %v328
        %v344 = vmul.f32 %v343, 0.6931472
        %v345 = vsub.f32 0.0, %v330
        %v346 = vsub.f32 0.0, %v332
        %v347 = vsub.f32 0.0, %v334
        %v348 = vsub.f32 0.0, %v336
        %v349 = vsub.f32 0.0, %v338
        %v350 = vsub.f32 0.0, %v340
        %v351 = vsub.f32 0.0, %v342
        %v352 = vsub.f32 0.0, %v344
        %v353 = vmax.f32 %v249, 0.0
        %v354 = vmax.f32 %v250, 0.0
        %v355 = vmax.f32 %v251, 0.0
        %v356 = vmax.f32 %v252, 0.0
        %v357 = vmax.f32 %v253, 0.0
        %v358 = vmax.f32 %v254, 0.0
        %v359 = vmax.f32 %v255, 0.0
        %v360 = vmax.f32 %v256, 0.0
        %v361 = vmul.f32 %v249, %v265
        %v362 = vmul.f32 %v250, %v266
        %v363 = vmul.f32 %v251, %v267
        %v364 = vmul.f32 %v252, %v268
        %v365 = vmul.f32 %v253, %v269
        %v366 = vmul.f32 %v254, %v270
        %v367 = vmul.f32 %v255, %v271
        %v368 = vmul.f32 %v256, %v272
        %v369 = vsub.f32 %v353, %v361
        %v370 = vsub.f32 %v354, %v362
        %v371 = vsub.f32 %v355, %v363
        %v372 = vsub.f32 %v356, %v364
        %v373 = vsub.f32 %v357, %v365
        %v374 = vsub.f32 %v358, %v366
        %v375 = vsub.f32 %v359, %v367
        %v376 = vsub.f32 %v360, %v368
        %v377 = vadd.f32 %v369, %v345
        %v378 = vadd.f32 %v370, %v346
        %v379 = vadd.f32 %v371, %v347
        %v380 = vadd.f32 %v372, %v348
        %v381 = vadd.f32 %v373, %v349
        %v382 = vadd.f32 %v374, %v350
        %v383 = vadd.f32 %v375, %v351
        %v384 = vadd.f32 %v376, %v352
        %v385 = vmul.f32 %v297, %v265
        %v386 = vmul.f32 %v298, %v266
        %v387 = vmul.f32 %v299, %v267
        %v388 = vmul.f32 %v300, %v268
        %v389 = vmul.f32 %v301, %v269
        %v390 = vmul.f32 %v302, %v270
        %v391 = vmul.f32 %v303, %v271
        %v392 = vmul.f32 %v304, %v272
        %v393 = vadd.f32 %v385, %v386
        %v394 = vadd.f32 %v393, %v387
        %v395 = vadd.f32 %v394, %v388
        %v396 = vadd.f32 %v395, %v389
        %v397 = vadd.f32 %v396, %v390
        %v398 = vadd.f32 %v397, %v391
        %v399 = vadd.f32 %v398, %v392
        %v400 = vadd.f32 %v399, 0.0
        %v401 = vadd.f32 %v297, %v298
        %v402 = vadd.f32 %v401, %v299
        %v403 = vadd.f32 %v402, %v300
        %v404 = vadd.f32 %v403, %v301
        %v405 = vadd.f32 %v404, %v302
        %v406 = vadd.f32 %v405, %v303
        %v407 = vadd.f32 %v406, %v304
        %v408 = vadd.f32 %v407, 0.0
        %v409 = vadd.f32 %v265, %v266
        %v410 = vadd.f32 %v409, %v267
        %v411 = vadd.f32 %v410, %v268
        %v412 = vadd.f32 %v411, %v269
        %v413 = vadd.f32 %v412, %v270
        %v414 = vadd.f32 %v413, %v271
        %v415 = vadd.f32 %v414, %v272
        %v416 = vadd.f32 %v415, 0.0
        %v417 = vadd.f32 %v377, %v378
        %v418 = vadd.f32 %v417, %v379
        %v419 = vadd.f32 %v418, %v380
        %v420 = vadd.f32 %v419, %v381
        %v421 = vadd.f32 %v420, %v382
        %v422 = vadd.f32 %v421, %v383
        %v423 = vadd.f32 %v422, %v384
        %v424 = vadd.f32 %v423, 0.0
        %p425 = scmp.eq.s32.totalorder %s29, 0
        // Predicated region
        $region37: #{tpu_custom_call.1} parent=27 // pred_check
          %p426 = pneg %p425
        $region38: #{tpu_custom_call.1} parent=27 // pred_check_branch
          %428 = sbr.rel (%p426) target = $region40
        $region39: #{tpu_custom_call.1} parent=27 // pred_region
          %429 = vst [vmem:[%s236] sm:$0xff] 0.0
          %430 = vst [vmem:[%s236 + $0x8] sm:$0xff] 0.0
          %431 = vst [vmem:[%s236 + $0x10] sm:$0xff] 0.0
          %432 = vst [vmem:[%s236 + $0x18] sm:$0xff] 0.0
        $region40: #{tpu_custom_call.1} parent=27 // pred_fallthru
          _
        %v433 = vld [vmem:[%s236] sm:$0xff]
        %v434 = vadd.f32 %v433, %v400
        %435 = vst [vmem:[%s236] sm:$0xff] %v434
        %v436 = vld [vmem:[%s236 + $0x8] sm:$0xff]
        %v437 = vadd.f32 %v436, %v408
        %438 = vst [vmem:[%s236 + $0x8] sm:$0xff] %v437
        %v439 = vld [vmem:[%s236 + $0x10] sm:$0xff]
        %v440 = vadd.f32 %v439, %v416
        %441 = vst [vmem:[%s236 + $0x10] sm:$0xff] %v440
        %v442 = vld [vmem:[%s236 + $0x18] sm:$0xff]
        %v443 = vadd.f32 %v442, %v424
        %444 = vst [vmem:[%s236 + $0x18] sm:$0xff] %v443
        %s445 = sand.u32 %s111, 1
        %s446 = scalar_lea.sflag [#allocation4], %s445
        %s447 = sand.u32 %s111, 1
        %s448 = smul.addr %s447, 32
        %s449 = scalar_lea.vmem [#allocation7], %s448
        // Predicated region
        $region41: #{tpu_custom_call.1} parent=27 // pred_check
          %p450 = pneg %p121
        $region42: #{tpu_custom_call.1} parent=27 // pred_check_branch
          %452 = sbr.rel (%p450) target = $region44
        $region43: #{tpu_custom_call.1} parent=27 // pred_region
          %s454 = ssub.s32 512, 512
          %455 = vsyncadd %s446, %s454
          %s456 = smul.addr %s28, 4
          %s457 = smul.addr %s27, 4
          %s458 = sadd.s32 %s456, %s457
          %s459 = smul.addr %s458, 128
          %s460 = scalar_lea.hbm %s2, %s459
          %s461 = sshll.u32 %s449, 4
          %s462 = int_to_ptr.vmem [resolvable:$true] %s461
          %467 = dma.vmem_to_hbm [thread:$0]  %s462, 512, %s460, %s446, 128, 128, 8
        $region44: #{tpu_custom_call.1} parent=27 // pred_fallthru
          _
      $region28: #{tpu_custom_call.1} parent=5 // pred_fallthru
        _
      %p468 = scmp.le.s32.totalorder 2, %s17
      // Predicated region
      $region45: #{tpu_custom_call.1} parent=5 // pred_check
        %p469 = pneg %p468
      $region46: #{tpu_custom_call.1} parent=5 // pred_check_branch
        %471 = sbr.rel (%p469) target = $region48
      $region47: #{tpu_custom_call.1} parent=5 // pred_region
        %s472 = ssub.s32 %s17, 2
        // Predicated region
        $region49: #{tpu_custom_call.1} parent=47 // pred_check
          %p473 = pneg %p127
        $region50: #{tpu_custom_call.1} parent=47 // pred_check_branch
          %475 = sbr.rel (%p473) target = $region52
        $region51: #{tpu_custom_call.1} parent=47 // pred_region
          %s476 = sand.u32 %s112, 1
          %s477 = scalar_lea.sflag [#allocation4], %s476
          %s478 = sand.u32 %s112, 1
          %s479 = smul.addr %s478, 32
          %s480 = scalar_lea.vmem [#allocation7], %s479
          %481 = dma.done %s477, 512
        $region52: #{tpu_custom_call.1} parent=47 // pred_fallthru
          _
      $region48: #{tpu_custom_call.1} parent=5 // pred_fallthru
        _
    $region6: #{tpu_custom_call.1} parent=1 // loop_footer
      %s21 = sadd.s32 1, %s17
    $region7: #{tpu_custom_call.1} parent=1 // loop_footer_branch
      %16 = sbr.rel target = $region3
    $region8: #{tpu_custom_call.1} parent=1 // loop_exit
      _
    %482 = vsyncpa [#allocation3], 1
    %s483 = scalar_lea.sflag [#allocation3], 1
    %484 = vsyncpa %s483, 1
    %485 = vsyncpa [#allocation6], 1
    %s486 = scalar_lea.sflag [#allocation6], 1
    %487 = vsyncpa %s486, 1
    %488 = vsyncpa [#allocation4], 1
    %s489 = scalar_lea.sflag [#allocation4], 1
    %490 = vsyncpa %s489, 1

</llo_original>
